<compile_context>
chip_gen: v7x
topology: tpu7x:2x2x1
jax: 0.10.0
libtpu: 0.0.40
codegen_flags: <defaults>
</compile_context>

<pallas_src>
import numpy as np
import jax
import jax.numpy as jnp
from jax.experimental import pallas as pl
from jax.experimental.pallas import tpu as pltpu


# ----------------------------------------------------------------------------
# Spherical kernel-sampling-pattern construction (numpy, trace-time constants).
# Faithful port of spherenet's cal_index / cal_index_3d /
# gen_filters_coordinates_3d / gen_grid_coordinates_3d.
# ----------------------------------------------------------------------------
def _get_xy(delta_phi, delta_theta):
    return np.array([
        [
            (-np.tan(delta_theta), 1 / np.cos(delta_theta) * np.tan(delta_phi)),
            (0, np.tan(delta_phi)),
            (np.tan(delta_theta), 1 / np.cos(delta_theta) * np.tan(delta_phi)),
        ],
        [
            (-np.tan(delta_theta), 0),
            (1, 1),
            (np.tan(delta_theta), 0),
        ],
        [
            (-np.tan(delta_theta), -1 / np.cos(delta_theta) * np.tan(delta_phi)),
            (0, -np.tan(delta_phi)),
            (np.tan(delta_theta), -1 / np.cos(delta_theta) * np.tan(delta_phi)),
        ],
    ])


def cal_index(h, w, img_r, img_c):
    pi = np.pi
    phi = -((img_r + 0.5) / h * pi - pi / 2)
    theta = (img_c + 0.5) / w * 2 * pi - pi
    delta_phi = pi / h
    delta_theta = 2 * pi / w
    xys = _get_xy(delta_phi, delta_theta)
    x = xys[..., 0]
    y = xys[..., 1]
    rho = np.sqrt(x ** 2 + y ** 2)
    v = np.arctan(rho)
    with np.errstate(divide='ignore', invalid='ignore'):
        new_phi = np.arcsin(np.cos(v) * np.sin(phi) + y * np.sin(v) * np.cos(phi) / rho)
        new_theta = theta + np.arctan(
            x * np.sin(v) / (rho * np.cos(phi) * np.cos(v) - y * np.sin(phi) * np.sin(v)))
    new_r = (-new_phi + pi / 2) * h / pi - 0.5
    new_c = (new_theta + pi) * w / 2 / pi - 0.5
    new_c = (new_c + w) % w
    new_result = np.stack([new_r, new_c], axis=-1)
    new_result[1, 1] = (img_r, img_c)
    return new_result


def cal_index_3d(t, h, w, img_t, img_r, img_c):
    idx_2d = cal_index(h, w, img_r, img_c)
    idx_2d = np.stack([idx_2d, idx_2d, idx_2d], axis=0)
    tt_shape = (3, 3, 1)
    tt_mat = np.stack([np.full(tt_shape, max(img_t - 1, 0)),
                       np.full(tt_shape, img_t),
                       np.full(tt_shape, min(img_t + 1, t - 1))], axis=0)
    return np.concatenate([tt_mat, idx_2d], axis=3)


def gen_filters_coordinates_3d(t, h, w, stride=1):
    co = np.array([[[cal_index_3d(t, h, w, tt, i, j)
                     for j in range(0, w, stride)]
                    for i in range(0, h, stride)]
                   for tt in range(0, t, stride)])
    return np.ascontiguousarray(co.transpose([6, 0, 1, 2, 3, 4, 5]))


def gen_grid_coordinates_3d(t, h, w, stride=1):
    coordinates = gen_filters_coordinates_3d(t, h, w, stride).copy()
    coordinates[0] = coordinates[0] * 2 / t - 1
    coordinates[1] = coordinates[1] * 2 / h - 1
    coordinates[2] = coordinates[2] * 2 / w - 1
    coordinates = coordinates[::-1]
    coordinates = coordinates.transpose(1, 4, 2, 5, 3, 6, 0)
    sz = coordinates.shape
    coordinates = coordinates.reshape(1, sz[0] * sz[1], sz[2] * sz[3], sz[4] * sz[5], sz[6])
    return coordinates.copy()


# ----------------------------------------------------------------------------
# grid_sample(mode='bilinear', align_corners=True, padding_mode='zeros')
# -> static trilinear corner indices + weights (numpy, data-independent).
# ----------------------------------------------------------------------------
def _trilinear_corners(grid, T, H, W):
    """grid: (3T',3H',3W',3) normalized (x,y,z).  Returns flat corner indices
    and weights, each (27, N, 8), with k = kt*9+kh*3+kw, n = t*H'*W'+h*W'+w."""
    gx, gy, gz = grid[..., 0], grid[..., 1], grid[..., 2]
    ix = (gx + 1.0) * 0.5 * (W - 1)
    iy = (gy + 1.0) * 0.5 * (H - 1)
    iz = (gz + 1.0) * 0.5 * (T - 1)
    ix0, iy0, iz0 = np.floor(ix), np.floor(iy), np.floor(iz)
    tx, ty, tz = ix - ix0, iy - iy0, iz - iz0
    idx_list, w_list = [], []
    for dz in (0, 1):
        for dy in (0, 1):
            for dx in (0, 1):
                cz, cy, cx = iz0 + dz, iy0 + dy, ix0 + dx
                wgt = ((tz if dz else 1 - tz) *
                       (ty if dy else 1 - ty) *
                       (tx if dx else 1 - tx))
                valid = ((cz >= 0) & (cz <= T - 1) &
                         (cy >= 0) & (cy <= H - 1) &
                         (cx >= 0) & (cx <= W - 1))
                wgt = np.where(valid, wgt, 0.0)
                flat = (np.clip(cz, 0, T - 1).astype(np.int64) * (H * W) +
                        np.clip(cy, 0, H - 1).astype(np.int64) * W +
                        np.clip(cx, 0, W - 1).astype(np.int64))
                idx_list.append(flat)
                w_list.append(wgt)
    idx = np.stack(idx_list, axis=-1)   # (3T',3H',3W',8)
    wgt = np.stack(w_list, axis=-1)
    Dp, Hp, Wp = grid.shape[0] // 3, grid.shape[1] // 3, grid.shape[2] // 3

    def reorg(a):
        a = a.reshape(Dp, 3, Hp, 3, Wp, 3, 8)
        a = a.transpose(1, 3, 5, 0, 2, 4, 6)          # (kt,kh,kw,t,h,w,8)
        return a.reshape(27, Dp * Hp * Wp, 8)

    return reorg(idx).astype(np.int32), reorg(wgt).astype(np.float32)


# ----------------------------------------------------------------------------
# Pallas kernel: stride-3 conv3d contraction over K = 27*C, plus bias.
# bf16 x bf16 on the MXU, f32 accumulation / bias / output.
# ----------------------------------------------------------------------------
def _sphere_conv3d_kernel(xs_ref, wbig_ref, bias_ref, out_ref):
    # xs_ref  : (M, TN) bf16, lane dim = flattened output positions
    # wbig_ref: (O, M) bf16, bias_ref: (O, 1) f32, out_ref: (O, TN) f32
    out_ref[...] = (
        jnp.dot(wbig_ref[...], xs_ref[...], preferred_element_type=jnp.float32)
        + bias_ref[...]
    )


def _pick_tile_n(M, O_pad, N, *, tile_target=2048, budget_bytes=40 * 2**20):
    """Largest lane-dense tile_n whose double-buffered working set fits budget
    (budget chosen to be safe on v7x's 64 MiB/TC VMEM as well as v5e/v6e)."""
    per_col = 2 * M * 2 + 2 * O_pad * 4          # xs (bf16) + out (f32), 2 buffers each
    fixed = 2 * O_pad * M * 2 + 2 * O_pad * 4    # wbig (bf16) + bias (f32), 2 buffers
    # TODO(synk): if 27*C is so large that `fixed` alone blows the budget
    # (very large C and O), split K across grid steps with a VMEM accumulator.
    max_cols = max((budget_bytes - fixed) // per_col, 128)
    if N <= min(tile_target, max_cols):
        tile_n = N                               # single full-extent block (legal for any N)
    else:
        tile_n = int(min(tile_target, max_cols))
        if tile_n >= 256:
            tile_n = (tile_n // 256) * 256       # MXU-width multiple on v6e/v7x
        else:
            tile_n = 128
    return tile_n, fixed + per_col * tile_n


def _prepare_operands(x, weight, bias, stride):
    B, C, T, H, W = x.shape
    O = weight.shape[0]
    grid_np = gen_grid_coordinates_3d(T, H, W, stride)[0]
    idx_np, w8_np = _trilinear_corners(grid_np, T, H, W)       # (27, N, 8)
    N = idx_np.shape[1]
    M = 27 * C

    # TODO(synk): the static-index 8-corner gather of grid_sample still runs as
    # XLA glue; fusing it into the kernel (VMEM-resident x + in-kernel gather or
    # manual DMA gather of corner rows) would remove the 27x-expanded HBM
    # stream, but an arbitrary lane-axis gather does not lower reliably in
    # Mosaic today, so it stays upstream.
    x_flat = x.reshape(B, C, T * H * W)
    corners = x_flat[:, :, jnp.asarray(idx_np)]                     # (B, C, 27, N, 8)
    sampled = jnp.einsum('bcknj,knj->bckn', corners, jnp.asarray(w8_np))
    xs = sampled.transpose(0, 2, 1, 3).reshape(B, M, N)             # (B, 27*C, N)
    xs = xs.astype(jnp.bfloat16)     # mem-bound: halve the dominant stream

    # weight (O, C, 3, 3, 3) -> (O, 27, C) -> (O, 27*C); k-major then c,
    # matching xs's (k, c) ordering along M.  bf16 for the native MXU path.
    wbig = jnp.transpose(weight, (0, 2, 3, 4, 1)).reshape(O, M).astype(jnp.bfloat16)
    bias2d = bias.reshape(O, 1).astype(jnp.float32)

    # Sublane-dense stationary/output tiles: pad O up to a multiple of 8.
    O_pad = -(-O // 8) * 8
    if O_pad != O:
        wbig = jnp.pad(wbig, ((0, O_pad - O), (0, 0)))
        bias2d = jnp.pad(bias2d, ((0, O_pad - O), (0, 0)))

    out_spatial = (grid_np.shape[0] // 3, grid_np.shape[1] // 3, grid_np.shape[2] // 3)
    return xs, wbig, bias2d, N, out_spatial


def sphere_conv3d_forward(x, weight, bias, *, stride=1, tile_n=2048):
    """x: (B, C, T, H, W) f32; weight: (O, C, 3, 3, 3); bias: (O,)."""
    B = x.shape[0]
    O = weight.shape[0]
    xs, wbig, bias2d, N, (Tp, Hp, Wp) = _prepare_operands(x, weight, bias, stride)
    M = xs.shape[1]
    O_pad = wbig.shape[0]

    tn, vmem_need = _pick_tile_n(M, O_pad, N, tile_target=int(tile_n))
    n_tiles = int(pl.cdiv(N, tn))
    vmem_limit = int(min(max(vmem_need + 8 * 2**20, 16 * 2**20), 56 * 2**20))

    cost = pl.CostEstimate(
        flops=2 * B * O_pad * M * N,
        transcendentals=0,
        bytes_accessed=B * M * N * 2 + O_pad * M * 2 + O_pad * 4 + B * O_pad * N * 4,
    )

    out = pl.pallas_call(
        _sphere_conv3d_kernel,
        out_shape=jax.ShapeDtypeStruct((B, O_pad, N), jnp.float32),
        grid_spec=pltpu.PrefetchScalarGridSpec(
            num_scalar_prefetch=0,
            # n leading -> megacore-shardable even at B=1 (v7x); ragged last n
            # block handled by Pallas masked stores (no pad pass over xs).
            grid=(n_tiles, B),
            in_specs=[
                pl.BlockSpec((None, M, tn), lambda n, b: (b, 0, n)),
                pl.BlockSpec((O_pad, M), lambda n, b: (0, 0)),
                pl.BlockSpec((O_pad, 1), lambda n, b: (0, 0)),
            ],
            out_specs=pl.BlockSpec((None, O_pad, tn), lambda n, b: (b, 0, n)),
        ),
        compiler_params=pltpu.CompilerParams(
            dimension_semantics=("parallel", "parallel"),
            vmem_limit_bytes=vmem_limit),
        cost_estimate=cost,
    )(xs, wbig, bias2d)

    return out[:, :O, :].reshape(B, O, Tp, Hp, Wp)


def reference_forward(x, weight, bias, *, stride=1):
    """Plain-JAX reference (grid_sample-as-gather + conv3d-as-einsum), all f32."""
    B, C, T, H, W = x.shape
    O = weight.shape[0]
    grid_np = gen_grid_coordinates_3d(T, H, W, stride)[0]
    idx_np, w8_np = _trilinear_corners(grid_np, T, H, W)
    x_flat = x.reshape(B, C, T * H * W)
    corners = x_flat[:, :, jnp.asarray(idx_np)]                   # (B,C,27,N,8)
    sampled = jnp.einsum('bcknj,knj->bckn', corners, jnp.asarray(w8_np))
    wk = jnp.transpose(weight, (0, 2, 3, 4, 1)).reshape(O, 27, C)
    out = jnp.einsum('bckn,okc->bon', sampled, wk) + bias[None, :, None]
    Tp, Hp, Wp = grid_np.shape[0] // 3, grid_np.shape[1] // 3, grid_np.shape[2] // 3
    return out.reshape(B, O, Tp, Hp, Wp)


if __name__ == "__main__":
    B, in_c, out_c = 2, 4, 8
    T, H, W = 4, 8, 8

    key = jax.random.PRNGKey(0)
    kx, kw = jax.random.split(key)
    x = jax.random.normal(kx, (B, in_c, T, H, W), dtype=jnp.float32)

    # Deterministic parameter init mirroring reset_parameters():
    # kaiming_uniform_(a=sqrt(5)) => U(-1/sqrt(fan_in), 1/sqrt(fan_in)); bias zeroed.
    fan_in = in_c * 3 * 3 * 3
    bound = 1.0 / np.sqrt(fan_in)
    weight = jax.random.uniform(kw, (out_c, in_c, 3, 3, 3), jnp.float32, -bound, bound)
    bias = jnp.zeros((out_c,), jnp.float32)

    out = jax.block_until_ready(sphere_conv3d_forward(x, weight, bias))
    ref = jax.block_until_ready(reference_forward(x, weight, bias))

    assert out.shape == (B, out_c, T, H, W), out.shape
    # bf16 operand streams (xs and weights) vs the all-f32 reference -> widened tolerance.
    np.testing.assert_allclose(np.asarray(out), np.asarray(ref), rtol=2e-2, atol=3e-2)
    print("KERNEL_OK")
</pallas_src>

<mosaic_0001>
module attributes {stable_mosaic.version = 11 : i64} {
  func.func @_sphere_conv3d_kernel(%arg0: i32, %arg1: i32, %arg2: memref<1x108x256xbf16, #tpu.memory_space<vmem>>, %arg3: memref<8x108xbf16, #tpu.memory_space<vmem>>, %arg4: memref<8x1xf32, #tpu.memory_space<vmem>>, %arg5: memref<1x8x256xf32, #tpu.memory_space<vmem>>) attributes {dimension_semantics = [#tpu.dimension_semantics<parallel>, #tpu.dimension_semantics<parallel>], iteration_bounds = array<i64: 1, 2>, scalar_prefetch = 0 : i64, scratch_operands = 0 : i64, tpu.core_type = #tpu.core_type<tc>, window_params = [{transform_indices = @transform_0, window_bounds = array<i64: 1, 108, 256>}, {pipeline_mode = #tpu.pipeline_mode<synchronous>, transform_indices = @transform_1, window_bounds = array<i64: 8, 108>}, {pipeline_mode = #tpu.pipeline_mode<synchronous>, transform_indices = @transform_2, window_bounds = array<i64: 8, 1>}, {transform_indices = @transform_3, window_bounds = array<i64: 1, 8, 256>}]} {
    %c0 = arith.constant 0 : index
    %c0_0 = arith.constant 0 : index
    %0 = vector.load %arg3[%c0, %c0_0] : memref<8x108xbf16, #tpu.memory_space<vmem>>, vector<8x108xbf16>
    %c0_1 = arith.constant 0 : index
    %c0_2 = arith.constant 0 : index
    %c0_3 = arith.constant 0 : index
    %1 = vector.load %arg2[%c0_1, %c0_2, %c0_3] : memref<1x108x256xbf16, #tpu.memory_space<vmem>>, vector<1x108x256xbf16>
    %2 = vector.shape_cast %1 : vector<1x108x256xbf16> to vector<108x256xbf16>
    %cst = arith.constant dense<0.000000e+00> : vector<8x256xf32>
    %3 = tpu.matmul %0, %2, %cst {dimension_numbers = #tpu.dot_dimension_numbers<[1], [0], [0], [1], [0, 0, 1, 1], [], []>} : vector<8x108xbf16>, vector<108x256xbf16>, vector<8x256xf32> -> vector<8x256xf32>
    %c0_4 = arith.constant 0 : index
    %c0_5 = arith.constant 0 : index
    %4 = vector.load %arg4[%c0_4, %c0_5] : memref<8x1xf32, #tpu.memory_space<vmem>>, vector<8x1xf32>
    %5 = vector.broadcast %4 : vector<8x1xf32> to vector<8x256xf32>
    %6 = arith.addf %3, %5 : vector<8x256xf32>
    %c0_6 = arith.constant 0 : index
    %c0_7 = arith.constant 0 : index
    %c0_8 = arith.constant 0 : index
    %7 = vector.load %arg5[%c0_6, %c0_7, %c0_8] : memref<1x8x256xf32, #tpu.memory_space<vmem>>, vector<1x8x256xf32>
    %8 = vector.shape_cast %7 : vector<1x8x256xf32> to vector<8x256xf32>
    %9 = vector.shape_cast %6 : vector<8x256xf32> to vector<1x8x256xf32>
    tpu.vector_store %arg5[%c0_6, %c0_7, %c0_8], %9 {strides = array<i32>} : memref<1x8x256xf32, #tpu.memory_space<vmem>>, vector<1x8x256xf32>,
    return
  }
  func.func @transform_0(%arg0: i32, %arg1: i32) -> (i32, i32, i32) {
    %c0_i32 = arith.constant 0 : i32
    %c0_i32_0 = arith.constant 0 : i32
    return %arg1, %c0_i32, %arg0 : i32, i32, i32
  }
  func.func @transform_1(%arg0: i32, %arg1: i32) -> (i32, i32) {
    %c0_i32 = arith.constant 0 : i32
    %c0_i32_0 = arith.constant 0 : i32
    %c0_i32_1 = arith.constant 0 : i32
    return %c0_i32, %c0_i32_0 : i32, i32
  }
  func.func @transform_2(%arg0: i32, %arg1: i32) -> (i32, i32) {
    %c0_i32 = arith.constant 0 : i32
    %c0_i32_0 = arith.constant 0 : i32
    %c0_i32_1 = arith.constant 0 : i32
    return %c0_i32, %c0_i32_0 : i32, i32
  }
  func.func @transform_3(%arg0: i32, %arg1: i32) -> (i32, i32, i32) {
    %c0_i32 = arith.constant 0 : i32
    %c0_i32_0 = arith.constant 0 : i32
    return %arg1, %c0_i32, %arg0 : i32, i32, i32
  }
}

</mosaic_0001>

<llo_original>
// kernel: tpu_custom_call.1
$region0: #{tpu_custom_call.1}
  #allocation0 [shape = 'u32[]', space=smem, size = 0x4, offset = 0x4, fixed_abs, tag = 'smem constant byte address 0x4 - core index']
  #allocation1 [shape = 'u32[144,128]{1,0:T(1,128)}', space=vmem, size = 0x12000, scoped, tag = 'internal scratch']
  %s0 = inlined_call_operand.vmem [shape: bf16[2,108,256], index: 0, kind: input, shape index: {}]
  %s1 = inlined_call_operand.vmem [shape: bf16[8,108], index: 1, kind: input, shape index: {}]
  %s2 = inlined_call_operand.vmem [shape: f32[8,1], index: 2, kind: input, shape index: {}]
  %s3 = inlined_call_operand.hbm [shape: f32[2,8,256], index: 3, kind: output, shape index: {}]
  %s4 = sld [smem:[#allocation0]]
  $region45: #{tpu_custom_call.1} parent=0
    _
  %s6 = ssub.s32 1, %s4
  %s7 = scalar_select 0, %s6, %s4
  $region1: #{tpu_custom_call.1} parent=0
    #allocation2 [shape = 'u8[16384]{0}', space=vmem, size = 0x4000, scoped, tag = 'output window, operand 0']
    #allocation3 [shape = 's32[2]{0}', space=sflag, size = 0x8, scoped, tag = 'scoped memory for tpu_custom_call.1']
    %8 = vsyncpa [#allocation3], 0
    %s9 = scalar_lea.sflag [#allocation3], 1
    %10 = vsyncpa %s9, 0
    loop: start=0, step=1, limit=4
    $region2: #{tpu_custom_call.1} parent=1 // loop_pre_header
      _
    $region3: #{tpu_custom_call.1} parent=1 // loop_header
      %s12 = sphi 0, %s16
      %p13 = scmp.ge.s32.totalorder %s12, 4
      %s19 = sphi 0, %s31
      %s20 = sphi 0, %s27
      %s21 = sphi 0, %s19
      %s22 = sphi 0, %s20
      %s23 = sphi 0, %s21
      %s24 = sphi 0, %s22
      %s36 = sphi 0, %s38
      %s39 = sphi 0, %s36
      %s40 = sphi 0, %s39
      %s56 = sphi 0, %s40
      %s60 = sphi 0, %s60
      %s62 = sphi 0, %s60
      %s63 = sphi 0, %s62
      %s77 = sphi 0, %s63
      %s81 = sphi 0, %s81
      %s83 = sphi 0, %s81
      %s84 = sphi 0, %s83
      %s98 = sphi 0, %s84
      %s106 = sphi 0, %s108
      %s109 = sphi 0, %s106
      %s110 = sphi 0, %s109
      %s126 = sphi 0, %s110
    $region4: #{tpu_custom_call.1} parent=1 // loop_header_branch
      %15 = sbr.rel (%p13) target = $region8
    $region5: #{tpu_custom_call.1} parent=1 // loop_body
      %s17 = ssub.s32 %s12, 1
      %s18 = ssub.s32 %s12, 2
      %s25 = sadd.s32 1, %s20
      %p26 = scmp.ge.s32.totalorder %s25, 2
      %s27 = scalar_select %p26, 0, %s25
      %s28 = sadd.s32 1, %s19
      %s29 = scalar_select %p26, %s28, %s19
      %p30 = scmp.ge.s32.totalorder %s29, 1
      %s31 = scalar_select %p30, 0, %s29
      %s32 = ssub.s32 %s20, %s27
      %s33 = ssub.s32 %s19, %s31
      %s34 = sor.u32 %s32, %s33
      %p35 = scmp.eq.s32.totalorder %s34, 0
      %s37 = sadd.s32 %s36, 1
      %s38 = scalar_select %p35, %s36, %s37
      %p41 = pneg %p35
      %p42 = scmp.eq.s32.totalorder %s12, 1
      %p43 = por %p41, %p42
      %p44 = scmp.ne.s32.totalorder %s36, %s39
      %p45 = scmp.eq.s32.totalorder %s12, 0
      %p46 = por %p44, %p45
      %p47 = scmp.ne.s32.totalorder %s36, %s39
      %p48 = scmp.eq.s32.totalorder %s17, 1
      %p49 = por %p47, %p48
      %p50 = scmp.ne.s32.totalorder %s39, %s40
      %p51 = scmp.eq.s32.totalorder %s17, 0
      %p52 = por %p50, %p51
      %p53 = scmp.ne.s32.totalorder %s39, %s40
      %p54 = scmp.eq.s32.totalorder %s18, 1
      %p55 = por %p53, %p54
      %p57 = scmp.ne.s32.totalorder %s40, %s56
      %p58 = scmp.eq.s32.totalorder %s18, 0
      %p59 = por %p57, %p58
      %s61 = sadd.s32 %s60, 1
      %p64 = scmp.eq.s32.totalorder %s12, 1
      %p65 = scmp.ne.s32.totalorder %s60, %s62
      %p66 = scmp.eq.s32.totalorder %s12, 0
      %p67 = por %p65, %p66
      %p68 = scmp.ne.s32.totalorder %s60, %s62
      %p69 = scmp.eq.s32.totalorder %s17, 1
      %p70 = por %p68, %p69
      %p71 = scmp.ne.s32.totalorder %s62, %s63
      %p72 = scmp.eq.s32.totalorder %s17, 0
      %p73 = por %p71, %p72
      %p74 = scmp.ne.s32.totalorder %s62, %s63
      %p75 = scmp.eq.s32.totalorder %s18, 1
      %p76 = por %p74, %p75
      %p78 = scmp.ne.s32.totalorder %s63, %s77
      %p79 = scmp.eq.s32.totalorder %s18, 0
      %p80 = por %p78, %p79
      %s82 = sadd.s32 %s81, 1
      %p85 = scmp.eq.s32.totalorder %s12, 1
      %p86 = scmp.ne.s32.totalorder %s81, %s83
      %p87 = scmp.eq.s32.totalorder %s12, 0
      %p88 = por %p86, %p87
      %p89 = scmp.ne.s32.totalorder %s81, %s83
      %p90 = scmp.eq.s32.totalorder %s17, 1
      %p91 = por %p89, %p90
      %p92 = scmp.ne.s32.totalorder %s83, %s84
      %p93 = scmp.eq.s32.totalorder %s17, 0
      %p94 = por %p92, %p93
      %p95 = scmp.ne.s32.totalorder %s83, %s84
      %p96 = scmp.eq.s32.totalorder %s18, 1
      %p97 = por %p95, %p96
      %p99 = scmp.ne.s32.totalorder %s84, %s98
      %p100 = scmp.eq.s32.totalorder %s18, 0
      %p101 = por %p99, %p100
      %s102 = ssub.s32 %s20, %s27
      %s103 = ssub.s32 %s19, %s31
      %s104 = sor.u32 %s102, %s103
      %p105 = scmp.eq.s32.totalorder %s104, 0
      %s107 = sadd.s32 %s106, 1
      %s108 = scalar_select %p105, %s106, %s107
      %p111 = pneg %p105
      %p112 = scmp.eq.s32.totalorder %s12, 1
      %p113 = por %p111, %p112
      %p114 = scmp.ne.s32.totalorder %s106, %s109
      %p115 = scmp.eq.s32.totalorder %s12, 0
      %p116 = por %p114, %p115
      %p117 = scmp.ne.s32.totalorder %s106, %s109
      %p118 = scmp.eq.s32.totalorder %s17, 1
      %p119 = por %p117, %p118
      %p120 = scmp.ne.s32.totalorder %s109, %s110
      %p121 = scmp.eq.s32.totalorder %s17, 0
      %p122 = por %p120, %p121
      %p123 = scmp.ne.s32.totalorder %s109, %s110
      %p124 = scmp.eq.s32.totalorder %s18, 1
      %p125 = por %p123, %p124
      %p127 = scmp.ne.s32.totalorder %s110, %s126
      %p128 = scmp.eq.s32.totalorder %s18, 0
      %p129 = por %p127, %p128
      %p130 = scmp.le.s32.totalorder 1, %s12
      %p131 = scmp.lt.s32.totalorder %s12, 3
      %p132 = pnand %p130, %p131
      %p133 = pneg %p132
      // Predicated region
      $region9: #{tpu_custom_call.1} parent=5 // pred_check
        _
      $region10: #{tpu_custom_call.1} parent=5 // pred_check_branch
        %135 = sbr.rel (%p132) target = $region12
      $region11: #{tpu_custom_call.1} parent=5 // pred_region
        %s136 = ssub.s32 %s12, 1
        // Predicated region
        $region13: #{tpu_custom_call.1} parent=11 // pred_check
          %p137 = pneg %p73
        $region14: #{tpu_custom_call.1} parent=11 // pred_check_branch
          %139 = sbr.rel (%p137) target = $region16
        $region15: #{tpu_custom_call.1} parent=11 // pred_region
          _
        $region16: #{tpu_custom_call.1} parent=11 // pred_fallthru
          _
        // Predicated region
        $region17: #{tpu_custom_call.1} parent=11 // pred_check
          %p140 = pneg %p94
        $region18: #{tpu_custom_call.1} parent=11 // pred_check_branch
          %142 = sbr.rel (%p140) target = $region20
        $region19: #{tpu_custom_call.1} parent=11 // pred_region
          _
        $region20: #{tpu_custom_call.1} parent=11 // pred_fallthru
          _
      $region12: #{tpu_custom_call.1} parent=5 // pred_fallthru
        _
      %p143 = scmp.lt.s32.totalorder %s12, 2
      // Predicated region
      $region21: #{tpu_custom_call.1} parent=5 // pred_check
        %p144 = pneg %p143
      $region22: #{tpu_custom_call.1} parent=5 // pred_check_branch
        %146 = sbr.rel (%p144) target = $region24
      $region23: #{tpu_custom_call.1} parent=5 // pred_region
        // Predicated region
        $region25: #{tpu_custom_call.1} parent=23 // pred_check
          %p147 = pneg %p46
        $region26: #{tpu_custom_call.1} parent=23 // pred_check_branch
          %149 = sbr.rel (%p147) target = $region28
        $region27: #{tpu_custom_call.1} parent=23 // pred_region
          %s150 = smul.u32 2, %s19
          %p151 = scmp.lt.s32.totalorder %s20, 1
          %s152 = scalar_select %p151, %s20, 1
          %p153 = scmp.lt.s32.totalorder %s150, 1
          %s154 = scalar_select %p153, %s150, 1
          %s155 = smul.addr %s152, 28
          %s156 = sadd.s32 %s154, %s155
          %s157 = smul.addr %s156, 4
          %s158 = scalar_lea.vmem %s0, %s157
          %s159 = smul.u32 2, %s19
        $region28: #{tpu_custom_call.1} parent=23 // pred_fallthru
          _
      $region24: #{tpu_custom_call.1} parent=5 // pred_fallthru
        _
      %p160 = scmp.le.s32.totalorder 1, %s12
      %p161 = scmp.lt.s32.totalorder %s12, 3
      %p162 = pnand %p160, %p161
      %p163 = pneg %p162
      // Predicated region
      $region29: #{tpu_custom_call.1} parent=5 // pred_check
        _
      $region30: #{tpu_custom_call.1} parent=5 // pred_check_branch
        %165 = sbr.rel (%p162) target = $region32
      $region31: #{tpu_custom_call.1} parent=5 // pred_region
        %s166 = ssub.s32 %s12, 1
        %s167 = smul.u32 2, %s21
        %p168 = scmp.lt.s32.totalorder %s22, 1
        %s169 = scalar_select %p168, %s22, 1
        %p170 = scmp.lt.s32.totalorder %s167, 1
        %s171 = scalar_select %p170, %s167, 1
        %s172 = smul.addr %s169, 28
        %s173 = sadd.s32 %s171, %s172
        %s174 = smul.addr %s173, 4
        %s175 = scalar_lea.vmem %s0, %s174
        %p176 = pneg %p52
        %p177 = pneg %p49
        %p178 = pneg %p73
        %p179 = pneg %p70
        %p180 = pneg %p94
        %p181 = pneg %p91
        %p182 = pneg %p122
        %p183 = pneg %p119
        %s184 = sand.u32 %s109, 1
        %s185 = scalar_lea.sflag [#allocation3], %s184
        %s186 = sand.u32 %s109, 1
        %s187 = smul.addr %s186, 16
        %s188 = scalar_lea.vmem [#allocation2], %s187
        %s189 = smul.u32 2, %s21
        %p190 = scmp.lt.s32.totalorder %s22, 1
        %s191 = scalar_select %p190, %s22, 1
        %p192 = scmp.lt.s32.totalorder %s189, 1
        %s193 = scalar_select %p192, %s189, 1
        %s194 = smul.addr %s191, 28
        %s195 = sadd.s32 %s193, %s194
        %s196 = smul.addr %s195, 4
        %s197 = scalar_lea.vmem %s0, %s196
        %s198 = smul.u32 2, %s21
        %s199 = smul.u32 2, %s21
        %v201 = vld [vmem:[%s1] sm:$0xf]
        %v202 = vld [vmem:[%s197] sm:$0xff]
        %v203 = vld [vmem:[%s197 + $0x8] sm:$0xff]
        %v204 = vld [vmem:[%s197 + $0x10] sm:$0xff]
        %v205 = vld [vmem:[%s197 + $0x18] sm:$0xff]
        %v206 = vld [vmem:[%s197 + $0x20] sm:$0xff]
        %v207 = vld [vmem:[%s197 + $0x28] sm:$0xff]
        %v208 = vld [vmem:[%s197 + $0x30] sm:$0xff]
        %v209 = vld [vmem:[%s197 + $0x38] sm:$0xff]
        %v210 = vld [vmem:[%s197 + $0x40] sm:$0xff]
        %v211 = vld [vmem:[%s197 + $0x48] sm:$0xff]
        %v212 = vld [vmem:[%s197 + $0x50] sm:$0xff]
        %v213 = vld [vmem:[%s197 + $0x58] sm:$0xff]
        %v214 = vld [vmem:[%s197 + $0x60] sm:$0xff]
        %v215 = vld [vmem:[%s197 + $0x68] sm:$0x33]
        %v216 = vld [vmem:[%s2] sm:$0xff]
        %218 = vset.pattern.permute.xlu0 0
        %219 = vperm.xlu0 %218, %v216
        %v220 = vpop.permute.xlu0 %219
        %v236 = vunpack.c.l.b16 %v202
        %v237 = vunpack.c.h.b16 %v202
        %v238 = vunpack.c.l.b16 %v203
        %v239 = vunpack.c.h.b16 %v203
        %v240 = vunpack.c.l.b16 %v204
        %v241 = vunpack.c.h.b16 %v204
        %v242 = vunpack.c.l.b16 %v205
        %v243 = vunpack.c.h.b16 %v205
        %v244 = vunpack.c.l.b16 %v206
        %v245 = vunpack.c.h.b16 %v206
        %v246 = vunpack.c.l.b16 %v207
        %v247 = vunpack.c.h.b16 %v207
        %v248 = vunpack.c.l.b16 %v208
        %v249 = vunpack.c.h.b16 %v208
        %v250 = vunpack.c.l.b16 %v209
        %v251 = vunpack.c.h.b16 %v209
        %v252 = vunpack.c.l.b16 %v210
        %v253 = vunpack.c.h.b16 %v210
        %v254 = vunpack.c.l.b16 %v211
        %v255 = vunpack.c.h.b16 %v211
        %v256 = vunpack.c.l.b16 %v212
        %v257 = vunpack.c.h.b16 %v212
        %v258 = vunpack.c.l.b16 %v213
        %v259 = vunpack.c.h.b16 %v213
        %v260 = vunpack.c.l.b16 %v214
        %v261 = vunpack.c.h.b16 %v214
        %v262 = vunpack.c.l.b16 %v215
        %v263 = vunpack.c.h.b16 %v215
        %v264 = vpack.c.b16 %v238, %v236
        %v265 = vpack.c.b16 %v239, %v237
        %v266 = vpack.c.b16 %v242, %v240
        %v267 = vpack.c.b16 %v243, %v241
        %v268 = vpack.c.b16 %v246, %v244
        %v269 = vpack.c.b16 %v247, %v245
        %v270 = vpack.c.b16 %v250, %v248
        %v271 = vpack.c.b16 %v251, %v249
        %v272 = vpack.c.b16 %v254, %v252
        %v273 = vpack.c.b16 %v255, %v253
        %v274 = vpack.c.b16 %v258, %v256
        %v275 = vpack.c.b16 %v259, %v257
        %v276 = vpack.c.b16 %v262, %v260
        %v277 = vpack.c.b16 %v263, %v261
        %vm290 = vcmask 883712
        %v292 = vsel %vm290, %v201, 0
        %vm294 = vcmask 1045504
        %v296 = vsel %vm294, %v276, 0
        %v299 = vsel %vm294, %v277, 0
        %301 = vmatprep.subr.bf16.mxu0 %v265
        %302 = vmatpush1.bf16.msra.mxu0 %v264
        %303 = vmatprep.subr.bf16.mxu0 %v267
        %304 = vmatpush1.bf16.msra.mxu0 %v266
        %305 = vmatprep.subr.bf16.mxu0 %v269
        %306 = vmatpush1.bf16.msra.mxu0 %v268
        %307 = vmatprep.subr.bf16.mxu0 %v271
        %308 = vmatpush1.bf16.msra.mxu0 %v270
        %309 = vmatprep.subr.bf16.mxu0 %v273
        %310 = vmatpush1.bf16.msra.mxu0 %v272
        %311 = vmatprep.subr.bf16.mxu0 %v275
        %312 = vmatpush1.bf16.msra.mxu0 %v274
        %313 = vmatprep.subr.bf16.mxu0 %v299
        %314 = vmatpush1.bf16.msra.mxu0 %v296
        %315 = vmatprep.subr.bf16.mxu0 0
        %316 = vmatpush1.bf16.msra.mxu0 0
        %317 = vmatprep.subr.bf16.mxu0 0
        %318 = vmatpush1.bf16.msra.mxu0 0
        %319 = vmatprep.subr.bf16.mxu0 0
        %320 = vmatpush1.bf16.msra.mxu0 0
        %321 = vmatprep.subr.bf16.mxu0 0
        %322 = vmatpush1.bf16.msra.mxu0 0
        %323 = vmatprep.subr.bf16.mxu0 0
        %324 = vmatpush1.bf16.msra.mxu0 0
        %325 = vmatprep.subr.bf16.mxu0 0
        %326 = vmatpush1.bf16.msra.mxu0 0
        %327 = vmatprep.subr.bf16.mxu0 0
        %328 = vmatpush1.bf16.msra.mxu0 0
        %329 = vmatprep.subr.bf16.mxu0 0
        %330 = vmatpush1.bf16.msra.mxu0 0
        %331 = vmatprep.subr.bf16.mxu0 0
        %332 = vmatpush1.bf16.msra.mxu0 0
        %333 = vmatprep.mubr.bf16.mxu0 0
        %334 = vmatmul.mubr.bf16.gmra.mrb[0].mxu0 %v292
        %v335 = vpop.f32.mrb[0].mxu0
        %v336 = vadd.f32 %v220, %v335
        %v337 = vpop.f32.mrb[0].mxu0
        %v338 = vadd.f32 %v220, %v337
        %v339 = vpop.f32.mrb[0].mxu0
        %v340 = vpop.f32.mrb[0].mxu0
        %341 = vdwg.mxu0
        %342 = vst [vmem:[%s188] sm:$0xff] %v336
        %343 = vst [vmem:[%s188 + $0x8] sm:$0xff] %v338
        %s344 = sand.u32 %s109, 1
        %s345 = scalar_lea.sflag [#allocation3], %s344
        %s346 = sand.u32 %s109, 1
        %s347 = smul.addr %s346, 16
        %s348 = scalar_lea.vmem [#allocation2], %s347
        // Predicated region
        $region33: #{tpu_custom_call.1} parent=31 // pred_check
          %p349 = pneg %p119
        $region34: #{tpu_custom_call.1} parent=31 // pred_check_branch
          %351 = sbr.rel (%p349) target = $region36
        $region35: #{tpu_custom_call.1} parent=31 // pred_region
          %s352 = smul.u32 2, %s21
          %s354 = ssub.s32 256, 256
          %355 = vsyncadd %s345, %s354
          %s356 = smul.addr %s22, 2
          %s357 = sadd.s32 %s352, %s356
          %s358 = smul.addr %s357, 128
          %s359 = scalar_lea.hbm %s3, %s358
          %s361 = sshll.u32 %s348, 4
          %s362 = int_to_ptr.vmem [resolvable:$true] %s361
          %364 = dma.vmem_to_hbm [thread:$0]  %s362, 256, %s359, %s345
        $region36: #{tpu_custom_call.1} parent=31 // pred_fallthru
          _
      $region32: #{tpu_custom_call.1} parent=5 // pred_fallthru
        _
      %p365 = scmp.le.s32.totalorder 2, %s12
      // Predicated region
      $region37: #{tpu_custom_call.1} parent=5 // pred_check
        %p366 = pneg %p365
      $region38: #{tpu_custom_call.1} parent=5 // pred_check_branch
        %368 = sbr.rel (%p366) target = $region40
      $region39: #{tpu_custom_call.1} parent=5 // pred_region
        %s369 = ssub.s32 %s12, 2
        // Predicated region
        $region41: #{tpu_custom_call.1} parent=39 // pred_check
          %p370 = pneg %p125
        $region42: #{tpu_custom_call.1} parent=39 // pred_check_branch
          %372 = sbr.rel (%p370) target = $region44
        $region43: #{tpu_custom_call.1} parent=39 // pred_region
          %s373 = sand.u32 %s110, 1
          %s374 = scalar_lea.sflag [#allocation3], %s373
          %s375 = sand.u32 %s110, 1
          %s376 = smul.addr %s375, 16
          %s377 = scalar_lea.vmem [#allocation2], %s376
          %378 = dma.done %s374, 256
        $region44: #{tpu_custom_call.1} parent=39 // pred_fallthru
          _
      $region40: #{tpu_custom_call.1} parent=5 // pred_fallthru
        _
    $region6: #{tpu_custom_call.1} parent=1 // loop_footer
      %s16 = sadd.s32 1, %s12
    $region7: #{tpu_custom_call.1} parent=1 // loop_footer_branch
      %11 = sbr.rel target = $region3
    $region8: #{tpu_custom_call.1} parent=1 // loop_exit
      _
    %379 = vsyncpa [#allocation3], 1
    %s380 = scalar_lea.sflag [#allocation3], 1
    %381 = vsyncpa %s380, 1

</llo_original>
